<compile_context>
chip_gen: v7x
topology: tpu7x:2x2x1
jax: 0.10.0
libtpu: 0.0.40
codegen_flags: <defaults>
</compile_context>

<pallas_src>
import functools

import jax
import jax.numpy as jnp
from jax.experimental import pallas as pl
from jax.experimental.pallas import tpu as pltpu


_LANE = 128
_TOTAL_VMEM_BUDGET = 20 * 1024 * 1024   # design budget for tiles + temporaries
_VMEM_LIMIT_CAP = 32 * 1024 * 1024      # never request above the v6e/v7x default


def _round_up(x, m):
    return ((x + m - 1) // m) * m


def _row_multiple(dtype):
    # Sublane packing multiple: 8 rows for 4-byte, 16 for 2-byte, 32 for 1-byte.
    return {1: 32, 2: 16, 4: 8}.get(jnp.dtype(dtype).itemsize, 8)


def _estimate_vmem_bytes(tn, c, itemsize, n_streamed_inputs):
    """Padded VMEM footprint: double-buffered input tiles + f32/i32 temporaries."""
    c_pad = _round_up(c, _LANE)
    in_bytes = n_streamed_inputs * 2 * tn * c_pad * itemsize   # 2 pipeline buffers each
    tmp_bytes = 4 * tn * c_pad * 4                             # x/t in f32, iota i32, masks
    out_bytes = 2 * 2 * tn * 4                                 # tiny per-row loss buffers
    return in_bytes + tmp_bytes + out_bytes


def _choose_tiling(n, c, dtype, n_streamed_inputs, block_rows=None):
    """Return (tile_rows, grid, lane_out)."""
    itemsize = jnp.dtype(dtype).itemsize
    row_mult = _row_multiple(dtype)

    if block_rows is not None:                       # explicit override (tests / tuning)
        tn = _round_up(block_rows, row_mult)
        grid = pl.cdiv(n, tn)
        lane_out = (tn % _LANE == 0) or grid == 1
        return tn, grid, lane_out

    c_pad = _round_up(c, _LANE)
    per_row_bytes = c_pad * (2 * n_streamed_inputs * itemsize + 4 * 4)
    max_rows = max(row_mult, _TOTAL_VMEM_BUDGET // per_row_bytes)

    if max_rows >= _LANE:
        # Lane-dense (1, tn) output path; tn is a multiple of 128.
        max_rows = (max_rows // _LANE) * _LANE
        n_pad = _round_up(n, row_mult)
        if n_pad < 2 * _LANE:
            # Too small to split across TensorCores: single (possibly ragged) tile.
            return n_pad, 1, True
        # >= 2 balanced tiles so the "parallel" axis keeps both v7x TCs busy.
        n_tiles = max(2, pl.cdiv(n, max_rows))
        tn = min(max_rows, _round_up(pl.cdiv(n, n_tiles), _LANE))
        grid = pl.cdiv(n, tn)
        return tn, grid, True

    # Large-C fallback: shrink row tiles below 128 and emit a (tn, 1) column output
    # so huge class counts stay within the VMEM budget and remain HBM-bound.
    # TODO(synk): for C so large that even a row_mult-row tile exceeds the budget,
    # a class-tiled online-softmax kernel (2-D grid, 'arbitrary' class axis) is needed.
    tn = max(row_mult, (max_rows // row_mult) * row_mult)
    grid = pl.cdiv(n, tn)
    return tn, grid, (grid == 1)


def _vmem_limit_bytes(tn, c, itemsize, n_streamed_inputs):
    est = _estimate_vmem_bytes(tn, c, itemsize, n_streamed_inputs)
    return int(min(_VMEM_LIMIT_CAP, max(20 * 1024 * 1024, est + 10 * 1024 * 1024)))


def _ce_soft_label_kernel(x_ref, t_ref, loss_ref, *, lane_out):
    # x_ref, t_ref: (TN, C) tiles in VMEM; loss_ref: (1, TN) lane-dense or (TN, 1).
    x = x_ref[...].astype(jnp.float32)
    t = t_ref[...].astype(jnp.float32)
    tn, c = x.shape

    # Stable log-sum-exp per row.
    m = jnp.max(x, axis=1, keepdims=True)
    lse = jnp.log(jnp.sum(jnp.exp(x - m), axis=1, keepdims=True)) + m

    # First-occurrence argmax of the soft target (matches torch.argmax tie-breaking).
    col = jax.lax.broadcasted_iota(jnp.int32, (tn, c), 1)
    t_max = jnp.max(t, axis=1, keepdims=True)
    is_max = t >= t_max                                    # computed once, reused
    arg_idx = jnp.min(jnp.where(is_max, col, c), axis=1, keepdims=True)   # (TN, 1)

    # Logit at the argmax class via masked sum (no one-hot f32 temporary).
    picked = jnp.sum(jnp.where(col == arg_idx, x, 0.0), axis=1, keepdims=True)

    row_loss = lse - picked                                # (TN, 1)
    if lane_out:
        loss_ref[...] = jnp.transpose(row_loss, (1, 0))    # lane-dense (1, TN) store
    else:
        loss_ref[...] = row_loss                           # large-C fallback (TN, 1)


def _ce_label_index_kernel(x_ref, lbl_ref, loss_ref, *, lane_out):
    # Fast path: labels are precomputed int32 argmax indices, no soft-target stream.
    x = x_ref[...].astype(jnp.float32)
    lbl = lbl_ref[...]                                     # (TN, 1) int32
    tn, c = x.shape

    m = jnp.max(x, axis=1, keepdims=True)
    lse = jnp.log(jnp.sum(jnp.exp(x - m), axis=1, keepdims=True)) + m

    col = jax.lax.broadcasted_iota(jnp.int32, (tn, c), 1)
    picked = jnp.sum(jnp.where(col == lbl, x, 0.0), axis=1, keepdims=True)

    row_loss = lse - picked
    if lane_out:
        loss_ref[...] = jnp.transpose(row_loss, (1, 0))
    else:
        loss_ref[...] = row_loss


def _run_ce_kernel(kernel, logits, second, second_cols, reduction, block_rows,
                   n_streamed_inputs):
    n, c = logits.shape
    itemsize = jnp.dtype(logits.dtype).itemsize
    tn, grid, lane_out = _choose_tiling(n, c, logits.dtype, n_streamed_inputs,
                                        block_rows)
    vmem_limit = _vmem_limit_bytes(tn, c, itemsize, n_streamed_inputs)

    if lane_out:
        out_shape = jax.ShapeDtypeStruct((1, grid * tn), jnp.float32)
        out_spec = pl.BlockSpec((1, tn), lambda i: (0, i))
    else:
        out_shape = jax.ShapeDtypeStruct((grid * tn, 1), jnp.float32)
        out_spec = pl.BlockSpec((tn, 1), lambda i: (i, 0))

    in_specs = [
        pl.BlockSpec((tn, c), lambda i: (i, 0)),
        pl.BlockSpec((tn, second_cols), lambda i: (i, 0)),
    ]
    # NOTE: if profiling shows DMA gaps at grid-step boundaries, the two input
    # specs can take pipeline_mode=pl.Buffered(3) where VMEM headroom allows.

    out = pl.pallas_call(
        functools.partial(kernel, lane_out=lane_out),
        out_shape=out_shape,
        grid=(grid,),
        in_specs=in_specs,
        out_specs=out_spec,
        compiler_params=pltpu.CompilerParams(
            dimension_semantics=("parallel",),
            vmem_limit_bytes=vmem_limit,
        ),
    )(logits, second)

    # Padded rows of the last (ragged) tile are discarded BEFORE any reduction.
    loss = out[0, :n] if lane_out else out[:n, 0]
    if reduction == "none":
        return loss
    elif reduction == "sum":
        return jnp.sum(loss)
    elif reduction == "mean":
        return jnp.mean(loss)
    raise ValueError(
        "unrecognized option, expect reduction to be one of none, mean, sum")


def ce_for_soft_label(logits, soft_target, reduction="mean", st_coef=1.0,
                      one_hot_gt_or_pseudo=None, block_rows=None):
    """JAX/Pallas equivalent of CEForSoftLabel.forward (default path)."""
    if one_hot_gt_or_pseudo is not None:
        # TODO(synk): boolean-mask indexing + torch.cat with data-dependent sizes
        # has no clean static-shape Pallas equivalent.
        raise NotImplementedError("one_hot_gt_or_pseudo path not supported")
    assert logits.ndim == 2 and logits.shape == soft_target.shape
    return _run_ce_kernel(_ce_soft_label_kernel, logits, soft_target,
                          logits.shape[1], reduction, block_rows,
                          n_streamed_inputs=2)


def ce_for_label_indices(logits, labels, reduction="mean", block_rows=None):
    """Bandwidth-saving fast path: pass precomputed int32 argmax labels instead of
    the full soft-target matrix (identical result, half the HBM read traffic)."""
    assert logits.ndim == 2 and labels.shape == (logits.shape[0],)
    labels2d = labels.astype(jnp.int32).reshape(-1, 1)
    return _run_ce_kernel(_ce_label_index_kernel, logits, labels2d, 1,
                          reduction, block_rows, n_streamed_inputs=1)


def _reference(logits, soft_target, reduction="mean"):
    # Pure-JAX reference for sanity checking.
    x = jax.nn.log_softmax(logits.astype(jnp.float32), axis=1)
    idx = jnp.argmax(soft_target, axis=1)
    onehot = jax.nn.one_hot(idx, logits.shape[1], dtype=jnp.float32)
    loss = jnp.sum(-x * onehot, axis=1)
    if reduction == "none":
        return loss
    if reduction == "sum":
        return jnp.sum(loss)
    return jnp.mean(loss)


if __name__ == "__main__":
    key = jax.random.PRNGKey(0)
    k1, k2, k3, k4 = jax.random.split(key, 4)

    # 1) Tiny single-tile case: 8 relation proposals x 32 predicate classes (f32).
    N1, C1 = 8, 32
    logits1 = jax.random.normal(k1, (N1, C1), dtype=jnp.float32)
    raw1 = jax.random.uniform(k2, (N1, C1), dtype=jnp.float32)
    tgt1 = raw1 / jnp.sum(raw1, axis=1, keepdims=True)
    out1 = jax.block_until_ready(ce_for_soft_label(logits1, tgt1, reduction="mean"))
    ref1 = _reference(logits1, tgt1, "mean")
    assert jnp.allclose(out1, ref1, atol=1e-5, rtol=1e-5), (out1, ref1)

    # 2) SGG-sized case (300 proposals x 51 predicates): default tiling gives >= 2
    #    balanced row tiles (v7x megacore) with a ragged last tile.
    N2, C2 = 300, 51
    logits2 = jax.random.normal(k3, (N2, C2), dtype=jnp.float32)
    raw2 = jax.random.uniform(k4, (N2, C2), dtype=jnp.float32)
    tgt2 = raw2 / jnp.sum(raw2, axis=1, keepdims=True)
    out2 = jax.block_until_ready(ce_for_soft_label(logits2, tgt2, reduction="none"))
    ref2 = _reference(logits2, tgt2, "none")
    assert out2.shape == (N2,) and jnp.allclose(out2, ref2, atol=1e-5, rtol=1e-5)
    out2m = jax.block_until_ready(ce_for_soft_label(logits2, tgt2, reduction="mean"))
    assert jnp.allclose(out2m, _reference(logits2, tgt2, "mean"), atol=1e-5, rtol=1e-5)

    # 3) Forced small lane-dense tiles (multi-tile pipeline) + 'sum'.
    out3 = jax.block_until_ready(
        ce_for_soft_label(logits2, tgt2, reduction="sum", block_rows=128))
    assert jnp.allclose(out3, _reference(logits2, tgt2, "sum"), atol=1e-3, rtol=1e-5)

    # 4) Column-output fallback (row tiles narrower than 128, as used for huge C).
    out4 = jax.block_until_ready(
        ce_for_soft_label(logits2, tgt2, reduction="none", block_rows=64))
    assert jnp.allclose(out4, ref2, atol=1e-5, rtol=1e-5)

    # 5) bf16 inputs (halved HBM traffic; kernel computes in f32, 16-row packing).
    logits5 = logits2.astype(jnp.bfloat16)
    tgt5 = tgt2.astype(jnp.bfloat16)
    out5 = jax.block_until_ready(ce_for_soft_label(logits5, tgt5, reduction="none"))
    ref5 = _reference(logits5, tgt5, "none")
    assert jnp.allclose(out5, ref5, atol=1e-5, rtol=1e-5)

    # 6) Label-index fast path (no soft-target stream at all).
    labels = jnp.argmax(tgt2, axis=1).astype(jnp.int32)
    out6 = jax.block_until_ready(ce_for_label_indices(logits2, labels, reduction="none"))
    assert jnp.allclose(out6, ref2, atol=1e-5, rtol=1e-5)

    print("KERNEL_OK")
</pallas_src>

<mosaic_0001>
module attributes {stable_mosaic.version = 11 : i64} {
  func.func @_ce_soft_label_kernel(%arg0: i32, %arg1: memref<8x32xf32, #tpu.memory_space<vmem>>, %arg2: memref<8x32xf32, #tpu.memory_space<vmem>>, %arg3: memref<1x8xf32, #tpu.memory_space<vmem>>) attributes {dimension_semantics = [#tpu.dimension_semantics<parallel>], iteration_bounds = array<i64: 1>, scalar_prefetch = 0 : i64, scratch_operands = 0 : i64, tpu.core_type = #tpu.core_type<tc>, window_params = [{transform_indices = @transform_0, window_bounds = array<i64: 8, 32>}, {transform_indices = @transform_1, window_bounds = array<i64: 8, 32>}, {transform_indices = @transform_2, window_bounds = array<i64: 1, 8>}]} {
    %c0 = arith.constant 0 : index
    %c0_0 = arith.constant 0 : index
    %0 = vector.load %arg1[%c0, %c0_0] : memref<8x32xf32, #tpu.memory_space<vmem>>, vector<8x32xf32>
    %c0_1 = arith.constant 0 : index
    %c0_2 = arith.constant 0 : index
    %1 = vector.load %arg2[%c0_1, %c0_2] : memref<8x32xf32, #tpu.memory_space<vmem>>, vector<8x32xf32>
    %cst = arith.constant dense<0xFF800000> : vector<8xf32>
    %2 = vector.multi_reduction <maximumf>, %0, %cst [1] : vector<8x32xf32> to vector<8xf32>
    %3 = vector.shape_cast %2 : vector<8xf32> to vector<8x1xf32>
    %4 = vector.broadcast %3 : vector<8x1xf32> to vector<8x32xf32>
    %5 = arith.subf %0, %4 : vector<8x32xf32>
    %6 = math.exp %5 : vector<8x32xf32>
    %cst_3 = arith.constant dense<0.000000e+00> : vector<8xf32>
    %7 = vector.multi_reduction <add>, %6, %cst_3 [1] : vector<8x32xf32> to vector<8xf32>
    %8 = vector.shape_cast %7 : vector<8xf32> to vector<8x1xf32>
    %9 = math.log %8 : vector<8x1xf32>
    %10 = arith.addf %9, %3 : vector<8x1xf32>
    %11 = tpu.iota {dimensions = array<i32: 1>} : vector<8x32xi32>
    %cst_4 = arith.constant dense<0xFF800000> : vector<8xf32>
    %12 = vector.multi_reduction <maximumf>, %1, %cst_4 [1] : vector<8x32xf32> to vector<8xf32>
    %13 = vector.shape_cast %12 : vector<8xf32> to vector<8x1xf32>
    %14 = vector.broadcast %13 : vector<8x1xf32> to vector<8x32xf32>
    %15 = arith.cmpf oge, %1, %14 : vector<8x32xf32>
    %c32_i32 = arith.constant 32 : i32
    %16 = vector.broadcast %c32_i32 : i32 to vector<8x32xi32>
    %17 = arith.select %15, %11, %16 : vector<8x32xi1>, vector<8x32xi32>
    %cst_5 = arith.constant dense<2147483647> : vector<8xi32>
    %18 = vector.multi_reduction <minsi>, %17, %cst_5 [1] : vector<8x32xi32> to vector<8xi32>
    %19 = vector.shape_cast %18 : vector<8xi32> to vector<8x1xi32>
    %20 = vector.broadcast %19 : vector<8x1xi32> to vector<8x32xi32>
    %21 = arith.cmpi eq, %11, %20 : vector<8x32xi32>
    %cst_6 = arith.constant 0.000000e+00 : f32
    %22 = vector.broadcast %cst_6 : f32 to vector<8x32xf32>
    %23 = arith.select %21, %0, %22 : vector<8x32xi1>, vector<8x32xf32>
    %cst_7 = arith.constant dense<0.000000e+00> : vector<8xf32>
    %24 = vector.multi_reduction <add>, %23, %cst_7 [1] : vector<8x32xf32> to vector<8xf32>
    %25 = vector.shape_cast %24 : vector<8xf32> to vector<8x1xf32>
    %26 = arith.subf %10, %25 : vector<8x1xf32>
    %27 = tpu.transpose %26, [1, 0] : vector<8x1xf32> -> vector<1x8xf32>
    %c0_8 = arith.constant 0 : index
    %c0_9 = arith.constant 0 : index
    %28 = vector.load %arg3[%c0_8, %c0_9] : memref<1x8xf32, #tpu.memory_space<vmem>>, vector<1x8xf32>
    tpu.vector_store %arg3[%c0_8, %c0_9], %27 {strides = array<i32>} : memref<1x8xf32, #tpu.memory_space<vmem>>, vector<1x8xf32>,
    return
  }
  func.func @transform_0(%arg0: i32) -> (i32, i32) {
    %c0_i32 = arith.constant 0 : i32
    %c0_i32_0 = arith.constant 0 : i32
    return %arg0, %c0_i32 : i32, i32
  }
  func.func @transform_1(%arg0: i32) -> (i32, i32) {
    %c0_i32 = arith.constant 0 : i32
    %c0_i32_0 = arith.constant 0 : i32
    return %arg0, %c0_i32 : i32, i32
  }
  func.func @transform_2(%arg0: i32) -> (i32, i32) {
    %c0_i32 = arith.constant 0 : i32
    %c0_i32_0 = arith.constant 0 : i32
    return %c0_i32, %arg0 : i32, i32
  }
}

</mosaic_0001>

<llo_original>
// kernel: tpu_custom_call.1
$region0: #{tpu_custom_call.1}
  #allocation0 [shape = 'u32[]', space=smem, size = 0x4, offset = 0x4, fixed_abs, tag = 'smem constant byte address 0x4 - core index']
  #allocation1 [shape = 'u32[144,128]{1,0:T(1,128)}', space=vmem, size = 0x12000, scoped, tag = 'internal scratch']
  %s0 = inlined_call_operand.hbm [shape: f32[8,32], index: 0, kind: input, shape index: {}]
  %s1 = inlined_call_operand.hbm [shape: f32[8,32], index: 1, kind: input, shape index: {}]
  %s2 = inlined_call_operand.hbm [shape: f32[1,8], index: 2, kind: output, shape index: {}]
  %s3 = sld [smem:[#allocation0]]
  $region26: #{tpu_custom_call.1} parent=0
    _
  %s5 = ssub.s32 1, %s3
  %s6 = scalar_select 0, %s5, %s3
  $region1: #{tpu_custom_call.1} parent=0
    #allocation2 [shape = 'u8[4096]{0}', space=vmem, size = 0x1000, scoped, tag = 'input window, operand 0, single buffered']
    #allocation3 [shape = 's32[1]{0}', space=sflag, size = 0x4, scoped, tag = 'scoped memory for tpu_custom_call.1']
    #allocation4 [shape = 's32[1]{0}', space=sflag, size = 0x4, scoped, tag = 'scoped memory for tpu_custom_call.1']
    #allocation5 [shape = 'u8[4096]{0}', space=vmem, size = 0x1000, scoped, tag = 'input window, operand 1, single buffered']
    #allocation6 [shape = 's32[1]{0}', space=sflag, size = 0x4, scoped, tag = 'scoped memory for tpu_custom_call.1']
    #allocation7 [shape = 'u8[512]{0}', space=vmem, size = 0x400, scoped, tag = 'output window, operand 0, single buffered']
    %7 = vsyncpa [#allocation3], 0
    %8 = vsyncpa [#allocation6], 0
    %9 = vsyncpa [#allocation4], 0
    // Predicated region
    $region2: #{tpu_custom_call.1} parent=1 // pred_check
      _
    $region3: #{tpu_custom_call.1} parent=1 // pred_check_branch
      %11 = sbr.rel (0) target = $region5
    $region4: #{tpu_custom_call.1} parent=1 // pred_region
      %s13 = ssub.s32 128, 128
      %14 = vsyncadd [#allocation3], %s13
      %s16 = sshll.u32 [#allocation2], 4
      %s17 = int_to_ptr.vmem [resolvable:$true] %s16
      %19 = dma.hbm_to_vmem [thread:$0]  %s0, 128, %s17, [#allocation3]
    $region5: #{tpu_custom_call.1} parent=1 // pred_fallthru
      _
    // Predicated region
    $region6: #{tpu_custom_call.1} parent=1 // pred_check
      _
    $region7: #{tpu_custom_call.1} parent=1 // pred_check_branch
      %21 = sbr.rel (0) target = $region9
    $region8: #{tpu_custom_call.1} parent=1 // pred_region
      %s23 = ssub.s32 128, 128
      %24 = vsyncadd [#allocation6], %s23
      %s26 = sshll.u32 [#allocation5], 4
      %s27 = int_to_ptr.vmem [resolvable:$true] %s26
      %29 = dma.hbm_to_vmem [thread:$0]  %s1, 128, %s27, [#allocation6]
    $region9: #{tpu_custom_call.1} parent=1 // pred_fallthru
      _
    // Predicated region
    $region10: #{tpu_custom_call.1} parent=1 // pred_check
      _
    $region11: #{tpu_custom_call.1} parent=1 // pred_check_branch
      %31 = sbr.rel (0) target = $region13
    $region12: #{tpu_custom_call.1} parent=1 // pred_region
      %32 = dma.done [#allocation3], 128
    $region13: #{tpu_custom_call.1} parent=1 // pred_fallthru
      _
    // Predicated region
    $region14: #{tpu_custom_call.1} parent=1 // pred_check
      _
    $region15: #{tpu_custom_call.1} parent=1 // pred_check_branch
      %34 = sbr.rel (0) target = $region17
    $region16: #{tpu_custom_call.1} parent=1 // pred_region
      %35 = dma.done [#allocation6], 128
    $region17: #{tpu_custom_call.1} parent=1 // pred_fallthru
      _
    %v36 = vld [vmem:[#allocation2] sm:$0xff]
    %v37 = vld [vmem:[#allocation5] sm:$0xff]
    %vm38 = vcmask 261120
    %v39 = vsel %vm38, %v36, -inf
    %40 = vmax.xlane.f32.xlu0 %v39
    %v41 = vpop.xlane.xlu0 %40
    %v42 = vsub.f32 %v36, %v41
    %v43 = vmul.f32 %v42, 1.442695
    %v44 = vpow.pop %v43
    %v45 = vsel %vm38, %v44, 0.0
    %46 = vadd.xlane.f32.xlu0 %v45
    %v47 = vpop.xlane.xlu0 %46
    %v48 = vlog2.pop %v47
    %v49 = vmul.f32 %v48, 0.6931472
    %v50 = vadd.f32 %v49, %v41
    %v51 = vlaneseq
    %v52 = vand.u32 %v51, 127
    %v53 = vsel %vm38, %v37, -inf
    %54 = vmax.xlane.f32.xlu0 %v53
    %v55 = vpop.xlane.xlu0 %54
    %vm56 = vcmp.ge.f32.partialorder %v37, %v55
    %v57 = vsel %vm56, %v52, 32
    %v58 = vsel %vm38, %v57, 2147483647
    %v59 = vand.u32 %v58, 65535
    %v60 = vshra.s32 %v58, 16
    %v61 = vcvt.s32.f32 %v59
    %v62 = vcvt.s32.f32 %v60
    %63 = vmin.xlane.f32.xlu0 %v62
    %v64 = vpop.xlane.xlu0 %63
    %vm65 = vcmp.eq.f32.partialorder %v62, %v64
    %v66 = vsel %vm65, %v61, inf
    %67 = vmin.xlane.f32.xlu0 %v66
    %v68 = vpop.xlane.xlu0 %67
    %v69 = vcvt.f32.s32 %v68
    %v70 = vcvt.f32.s32 %v64
    %v71 = vshll.u32 %v70, 16
    %v72 = vadd.s32 %v71, %v69
    %vm73 = vcmp.eq.s32.totalorder %v52, %v72
    %v74 = vsel %vm73, %v36, 0.0
    %v75 = vsel %vm38, %v74, 0.0
    %76 = vadd.xlane.f32.xlu0 %v75
    %v77 = vpop.xlane.xlu0 %76
    %v78 = vsub.f32 %v50, %v77
    %79 = vxpose.xlu0.b32.start [1/16] %v78, 128
    %80 = vxpose.xlu0.b32.cont [2/16] 0.0, 128
    %81 = vxpose.xlu0.b32.cont [3/16] 0.0, 128
    %82 = vxpose.xlu0.b32.cont [4/16] 0.0, 128
    %83 = vxpose.xlu0.b32.cont [5/16] 0.0, 128
    %84 = vxpose.xlu0.b32.cont [6/16] 0.0, 128
    %85 = vxpose.xlu0.b32.cont [7/16] 0.0, 128
    %86 = vxpose.xlu0.b32.cont [8/16] 0.0, 128
    %87 = vxpose.xlu0.b32.cont [9/16] 0.0, 128
    %88 = vxpose.xlu0.b32.cont [10/16] 0.0, 128
    %89 = vxpose.xlu0.b32.cont [11/16] 0.0, 128
    %90 = vxpose.xlu0.b32.cont [12/16] 0.0, 128
    %91 = vxpose.xlu0.b32.cont [13/16] 0.0, 128
    %92 = vxpose.xlu0.b32.cont [14/16] 0.0, 128
    %93 = vxpose.xlu0.b32.cont [15/16] 0.0, 128
    %94 = vxpose.xlu0.b32.end [16/16] 0.0, 128
    %v95 = vpop.trf.xlu0
    %v96 = vpop.trf.xlu0
    %v97 = vpop.trf.xlu0
    %v98 = vpop.trf.xlu0
    %v99 = vpop.trf.xlu0
    %v100 = vpop.trf.xlu0
    %v101 = vpop.trf.xlu0
    %v102 = vpop.trf.xlu0
    %v103 = vpop.trf.xlu0
    %v104 = vpop.trf.xlu0
    %v105 = vpop.trf.xlu0
    %v106 = vpop.trf.xlu0
    %v107 = vpop.trf.xlu0
    %v108 = vpop.trf.xlu0
    %v109 = vpop.trf.xlu0
    %v110 = vpop.trf.xlu0
    %vm111 = vcmask 57344
    %112 = vst.msk [vmem:[#allocation7] sm:$0x1] %vm111, %v95
    // Predicated region
    $region18: #{tpu_custom_call.1} parent=1 // pred_check
      _
    $region19: #{tpu_custom_call.1} parent=1 // pred_check_branch
      %114 = sbr.rel (0) target = $region21
    $region20: #{tpu_custom_call.1} parent=1 // pred_region
      %s116 = ssub.s32 16, 16
      %117 = vsyncadd [#allocation4], %s116
      %s119 = sshll.u32 [#allocation7], 4
      %s120 = int_to_ptr.vmem [resolvable:$true] %s119
      %122 = dma.vmem_to_hbm [thread:$0]  %s120, 16, %s2, [#allocation4]
    $region21: #{tpu_custom_call.1} parent=1 // pred_fallthru
      _
    // Predicated region
    $region22: #{tpu_custom_call.1} parent=1 // pred_check
      _
    $region23: #{tpu_custom_call.1} parent=1 // pred_check_branch
      %124 = sbr.rel (0) target = $region25
    $region24: #{tpu_custom_call.1} parent=1 // pred_region
      %125 = dma.done [#allocation4], 16
    $region25: #{tpu_custom_call.1} parent=1 // pred_fallthru
      _
    %126 = vsyncpa [#allocation3], 1
    %127 = vsyncpa [#allocation6], 1
    %128 = vsyncpa [#allocation4], 1

</llo_original>
